<compile_context>
chip_gen: v5e
topology: v5e:2x2
jax: 0.10.0
libtpu: 0.0.40
codegen_flags: <defaults>
</compile_context>

<pallas_src>
import math
import functools

import jax
import jax.numpy as jnp
from jax import lax
from jax.experimental import pallas as pl
from jax.experimental.pallas import tpu as pltpu


# ---------------------------------------------------------------------------
# Kernel 1: fused per-head QKV projection.
# Grid: 3 axes over (batch, seq-tiles, heads) (order picked by a residency
# heuristic). One (tm, d) @ (d, 3*hd) MXU push per step; Q is pre-scaled by
# 1/sqrt(head_dim) so the attention kernel never rescales scores.
# ---------------------------------------------------------------------------
def _qkv_proj_kernel(x_ref, wqkv_ref, q_ref, kv_ref, *, head_dim, scale):
    res = jnp.dot(x_ref[0], wqkv_ref[...], preferred_element_type=jnp.float32)
    q_ref[0, 0] = (res[:, :head_dim] * scale).astype(q_ref.dtype)
    kv_ref[0, 0] = res[:, head_dim:].astype(kv_ref.dtype)


# ---------------------------------------------------------------------------
# Kernel 2: differential flash attention + RMSNorm(head_dim) * (1-lambda_init).
# Grid: (outer0, outer1, q-tiles, kv-tiles), kv innermost ("arbitrary").
# Two online-softmax accumulator sets (branch 1 / branch 2), all sized (tq, .).
# ---------------------------------------------------------------------------
def _diff_attn_kernel(q_ref, kv_ref, lam_ref, o_ref,
                      m1, l1, acc1, m2, l2, acc2,
                      *, head_dim, lambda_init, eps, fuse_transpose):
    half = head_dim // 2
    ki = pl.program_id(3)
    nk = pl.num_programs(3)

    @pl.when(ki == 0)
    def _init():
        m1[...] = jnp.full_like(m1, -jnp.inf)
        m2[...] = jnp.full_like(m2, -jnp.inf)
        l1[...] = jnp.zeros_like(l1)
        l2[...] = jnp.zeros_like(l2)
        acc1[...] = jnp.zeros_like(acc1)
        acc2[...] = jnp.zeros_like(acc2)

    q = q_ref[0, 0]                     # (tq, hd) bf16, pre-scaled
    kvt = kv_ref[0, 0]                  # (tk, 2*hd) bf16
    k = kvt[:, :head_dim]
    v = kvt[:, head_dim:]

    dn = (((1,), (1,)), ((), ()))
    # TODO(synk): on v6e/v7x the two K=head_dim/2 score pushes and the two
    # N=head_dim PV pushes under-fill the 256-wide MXU; a block-diagonal score
    # layout / stacked-p PV matmul would halve the MXU push count per kv step.
    s1 = lax.dot_general(q[:, :half], k[:, :half], dn,
                         preferred_element_type=jnp.float32)
    s2 = lax.dot_general(q[:, half:], k[:, half:], dn,
                         preferred_element_type=jnp.float32)

    def _online_update(s, m_ref, l_ref, acc_ref):
        m_new = jnp.maximum(m_ref[...], jnp.max(s, axis=-1, keepdims=True))
        # TODO(synk): on v6e/v7x a bf16 exp roughly doubles EUP throughput if a
        # bundle dump shows the doubled-softmax exps are the binding unit.
        p = jnp.exp(s - m_new)
        alpha = jnp.exp(m_ref[...] - m_new)
        l_ref[...] = alpha * l_ref[...] + jnp.sum(p, axis=-1, keepdims=True)
        acc_ref[...] = alpha * acc_ref[...] + jnp.dot(
            p.astype(jnp.bfloat16), v, preferred_element_type=jnp.float32)
        m_ref[...] = m_new

    _online_update(s1, m1, l1, acc1)
    _online_update(s2, m2, l2, acc2)

    @pl.when(ki == nk - 1)
    def _finalize():
        lam = lam_ref[0]                 # SMEM scalar, computed in the wrapper
        # Exact divides here: runs once per (b, head, q-tile); the w1 - lam*w2
        # difference can nearly cancel, so skip the approximate reciprocal.
        out = acc1[...] / l1[...] - lam * (acc2[...] / l2[...])
        # RMSNorm over head_dim (elementwise_affine=False), PyTorch default eps.
        ms = jnp.mean(out * out, axis=-1, keepdims=True)
        normed = out * lax.rsqrt(ms + eps) * (1.0 - lambda_init)
        if fuse_transpose:
            # Write the transposed tile so (b, head_dim, heads*s) is produced
            # directly and the module's .view(b, s, d) becomes a free reshape.
            o_ref[0] = normed.T.astype(o_ref.dtype)
        else:
            o_ref[0, 0] = normed.astype(o_ref.dtype)


# ---------------------------------------------------------------------------
# Kernel 3: output projection, tiled over sequence (M) and output features (N).
# ---------------------------------------------------------------------------
def _out_proj_kernel(x_ref, w_ref, o_ref):
    # TODO(synk): for very large d, add a K grid axis with an f32 accumulator
    # instead of contracting the full hidden dim in one step.
    o_ref[0] = jnp.dot(x_ref[0], w_ref[...],
                       preferred_element_type=jnp.float32).astype(o_ref.dtype)


def _pick_tile(n, candidates):
    for c in candidates:
        if n % c == 0:
            return c
    return n


def differential_attention(x, wq, wk, wv, wo, lq1, lq2, lk1, lk2,
                           heads, lambda_init=0.8):
    b, s, d = x.shape
    head_dim = d // heads
    assert head_dim * heads == d and head_dim % 2 == 0
    eps = float(jnp.finfo(jnp.float32).eps)
    scale = 1.0 / math.sqrt(head_dim)   # PyTorch scales scores by sqrt(head_dim)

    # ---- generation-aware VMEM budget / tile selection ----------------------
    vmem_cap = 64 * 1024 * 1024         # conservative default (v7x physical)
    try:
        info = pltpu.get_tpu_info()
        vmem_cap = int(getattr(info, "vmem_capacity_bytes", vmem_cap))
    except Exception:
        pass
    vmem_limit = int(min(vmem_cap * 7 // 8, 100 * 1024 * 1024))
    big_vmem = vmem_cap >= 96 * 1024 * 1024   # v5e/v6e (128 MiB) vs v7x (64 MiB)

    tm = _pick_tile(s, (512, 256, 128))                       # projection M tile
    if big_vmem:
        tq = _pick_tile(s, (512, 256, 128))
        tk = _pick_tile(s, (1024, 512, 256, 128))
    else:
        tq = _pick_tile(s, (256, 128))
        tk = _pick_tile(s, (512, 256, 128))
    tmo = _pick_tile(s, (512, 256, 128))                      # out-proj M tile
    tn = _pick_tile(d, (512, 256, 128))                       # out-proj N tile

    # ---- operand prep: bf16 for the MXU (f32 accumulation inside kernels) ---
    x_bf = x.astype(jnp.bfloat16)
    wqT = wq.T.reshape(d, heads, head_dim)
    wkT = wk.T.reshape(d, heads, head_dim)
    wvT = wv.T.reshape(d, heads, head_dim)
    # Head h owns columns [h*3hd, (h+1)*3hd) = [Wq_h | Wk_h | Wv_h].
    wqkvT = jnp.concatenate([wqT, wkT, wvT], axis=-1).reshape(
        d, heads * 3 * head_dim).astype(jnp.bfloat16)
    woT = wo.T.astype(jnp.bfloat16)

    # lambda is constant across the whole grid: compute once, pass as SMEM scalar.
    lam = (jnp.exp(jnp.dot(lq1, lk1)) - jnp.exp(jnp.dot(lq2, lk2))
           + jnp.float32(lambda_init)).reshape(1).astype(jnp.float32)

    # ------------------------- Stage 1: QKV projection -----------------------
    n_m = s // tm
    # Grid order: keep whichever operand is cheaper to keep resident.
    weight_resident = (b * n_m - 1) * 3 * d * d > (heads - 1) * b * s * d
    if weight_resident:
        pgrid = (heads, b, n_m)
        px_map = lambda hi, bi, mi: (bi, mi, 0)
        pw_map = lambda hi, bi, mi: (0, hi)
        po_map = lambda hi, bi, mi: (bi, hi, mi, 0)
    else:
        pgrid = (b, n_m, heads)
        px_map = lambda bi, mi, hi: (bi, mi, 0)
        pw_map = lambda bi, mi, hi: (0, hi)
        po_map = lambda bi, mi, hi: (bi, hi, mi, 0)

    q, kv = pl.pallas_call(
        functools.partial(_qkv_proj_kernel, head_dim=head_dim, scale=scale),
        out_shape=(jax.ShapeDtypeStruct((b, heads, s, head_dim), jnp.bfloat16),
                   jax.ShapeDtypeStruct((b, heads, s, 2 * head_dim), jnp.bfloat16)),
        grid_spec=pltpu.PrefetchScalarGridSpec(
            num_scalar_prefetch=0,
            grid=pgrid,
            in_specs=[
                pl.BlockSpec((1, tm, d), px_map),                 # x tile
                pl.BlockSpec((d, 3 * head_dim), pw_map),          # [Wq|Wk|Wv]_h
            ],
            out_specs=[
                pl.BlockSpec((1, 1, tm, head_dim), po_map),       # Q (scaled)
                pl.BlockSpec((1, 1, tm, 2 * head_dim), po_map),   # [K|V]
            ],
        ),
        compiler_params=pltpu.CompilerParams(
            dimension_semantics=("parallel", "parallel", "parallel"),
            vmem_limit_bytes=vmem_limit),
    )(x_bf, wqkvT)

    # ------------------- Stage 2: differential flash attention ---------------
    n_q = s // tq
    n_k = s // tk
    # Fused-transpose output is only lane-blockable when s (hence tq) is a
    # multiple of 128; otherwise fall back to the natural per-head layout.
    fuse_transpose = (s % 128 == 0)

    if b >= heads:
        agrid = (b, heads, n_q, n_k)
        q_map = lambda bi, hi, qi, ki: (bi, hi, qi, 0)
        kv_map = lambda bi, hi, qi, ki: (bi, hi, ki, 0)
        if fuse_transpose:
            o_map = lambda bi, hi, qi, ki: (bi, 0, hi * n_q + qi)
        else:
            o_map = lambda bi, hi, qi, ki: (bi, hi, qi, 0)
    else:
        # b small: lead with heads so the leading parallel axis has extent >= 2
        # for v7x megacore sharding.
        agrid = (heads, b, n_q, n_k)
        q_map = lambda hi, bi, qi, ki: (bi, hi, qi, 0)
        kv_map = lambda hi, bi, qi, ki: (bi, hi, ki, 0)
        if fuse_transpose:
            o_map = lambda hi, bi, qi, ki: (bi, 0, hi * n_q + qi)
        else:
            o_map = lambda hi, bi, qi, ki: (bi, hi, qi, 0)

    if fuse_transpose:
        attn_out_shape = jax.ShapeDtypeStruct((b, head_dim, heads * s), jnp.bfloat16)
        attn_out_spec = pl.BlockSpec((1, head_dim, tq), o_map)
    else:
        attn_out_shape = jax.ShapeDtypeStruct((b, heads, s, head_dim), jnp.bfloat16)
        attn_out_spec = pl.BlockSpec((1, 1, tq, head_dim), o_map)

    attn_kernel = functools.partial(
        _diff_attn_kernel, head_dim=head_dim, lambda_init=float(lambda_init),
        eps=eps, fuse_transpose=fuse_transpose)

    # TODO(synk): on v5e/v6e (128 MiB VMEM) a deeper kv pipeline
    # (pipeline_mode=pl.Buffered(3)) would further hide the per-step kv DMA.
    normed = pl.pallas_call(
        attn_kernel,
        out_shape=attn_out_shape,
        grid_spec=pltpu.PrefetchScalarGridSpec(
            num_scalar_prefetch=0,
            grid=agrid,
            in_specs=[
                pl.BlockSpec((1, 1, tq, head_dim), q_map),         # Q tile (resident over kv)
                pl.BlockSpec((1, 1, tk, 2 * head_dim), kv_map),    # streamed [K|V] tile
                pl.BlockSpec(memory_space=pltpu.MemorySpace.SMEM), # lambda scalar
            ],
            out_specs=attn_out_spec,
            scratch_shapes=[
                pltpu.VMEM((tq, 1), jnp.float32),          # m1
                pltpu.VMEM((tq, 1), jnp.float32),          # l1
                pltpu.VMEM((tq, head_dim), jnp.float32),   # acc1
                pltpu.VMEM((tq, 1), jnp.float32),          # m2
                pltpu.VMEM((tq, 1), jnp.float32),          # l2
                pltpu.VMEM((tq, head_dim), jnp.float32),   # acc2
            ],
        ),
        compiler_params=pltpu.CompilerParams(
            dimension_semantics=("parallel", "parallel", "parallel", "arbitrary"),
            vmem_limit_bytes=vmem_limit),
    )(q, kv, lam)

    # ---- glue: reproduce the module's cat(dim=1) -> transpose(1,2) -> view ---
    if fuse_transpose:
        # (b, head_dim, heads*s) is exactly the contiguous layout the PyTorch
        # cat/transpose produces, so the .view(b, s, d) is a free reshape.
        o = normed.reshape(b, s, d)
    else:
        # TODO(synk): this permutation interleaves head_dim across sequence
        # positions (faithful to the original module); at lane-unaligned s it is
        # not blockable, so it stays as a cheap XLA transpose between kernels.
        o = jnp.transpose(normed, (0, 3, 1, 2)).reshape(b, s, d)

    # ------------------------ Stage 3: output projection ---------------------
    n_mo = s // tmo
    n_n = d // tn
    if b >= 2:
        ogrid = (b, n_mo, n_n)
        ox_map = lambda bi, mi, ni: (bi, mi, 0)
        ow_map = lambda bi, mi, ni: (0, ni)
        oo_map = lambda bi, mi, ni: (bi, mi, ni)
        osem = ("parallel", "parallel", "parallel")
    else:
        ogrid = (n_mo, n_n)
        ox_map = lambda mi, ni: (0, mi, 0)
        ow_map = lambda mi, ni: (0, ni)
        oo_map = lambda mi, ni: (0, mi, ni)
        osem = ("parallel", "parallel")

    out = pl.pallas_call(
        _out_proj_kernel,
        out_shape=jax.ShapeDtypeStruct((b, s, d), jnp.float32),
        grid_spec=pltpu.PrefetchScalarGridSpec(
            num_scalar_prefetch=0,
            grid=ogrid,
            in_specs=[
                pl.BlockSpec((1, tmo, d), ox_map),
                pl.BlockSpec((d, tn), ow_map),
            ],
            out_specs=pl.BlockSpec((1, tmo, tn), oo_map),
        ),
        compiler_params=pltpu.CompilerParams(
            dimension_semantics=osem, vmem_limit_bytes=vmem_limit),
    )(o, woT)
    return out


# ---------------------------------------------------------------------------
# Pure-JAX f32 reference (mirror of the PyTorch forward) for validation
# ---------------------------------------------------------------------------
def reference(x, wq, wk, wv, wo, lq1, lq2, lk1, lk2, heads, lambda_init=0.8):
    b, s, d = x.shape
    hd = d // heads
    q = (x @ wq.T).reshape(b, s, heads, hd).transpose(0, 2, 1, 3)
    k = (x @ wk.T).reshape(b, s, heads, hd).transpose(0, 2, 1, 3)
    v = (x @ wv.T).reshape(b, s, heads, hd).transpose(0, 2, 1, 3)
    q1, q2 = q[..., :hd // 2], q[..., hd // 2:]
    k1, k2 = k[..., :hd // 2], k[..., hd // 2:]
    s1 = jnp.einsum('bhqc,bhkc->bhqk', q1, k1) / math.sqrt(hd)
    s2 = jnp.einsum('bhqc,bhkc->bhqk', q2, k2) / math.sqrt(hd)
    w1 = jax.nn.softmax(s1, axis=-1)
    w2 = jax.nn.softmax(s2, axis=-1)
    lam = jnp.exp(jnp.dot(lq1, lk1)) - jnp.exp(jnp.dot(lq2, lk2)) + lambda_init
    attn = w1 - lam * w2
    out = jnp.einsum('bhqk,bhkc->bhqc', attn, v)
    eps = jnp.finfo(jnp.float32).eps
    normed = out * lax.rsqrt(jnp.mean(out * out, -1, keepdims=True) + eps)
    normed = normed * (1.0 - lambda_init)
    o = normed.reshape(b, heads * s, hd)
    o = jnp.transpose(o, (0, 2, 1)).reshape(b, s, d)
    return o @ wo.T


def _run_case(key, b, s, d, heads, lambda_init, tol):
    head_dim = d // heads
    keys = jax.random.split(key, 9)
    x = jax.random.normal(keys[0], (b, s, d), dtype=jnp.float32)

    w_scale = 1.0 / math.sqrt(d)
    wq = jax.random.normal(keys[1], (d, d), dtype=jnp.float32) * w_scale
    wk = jax.random.normal(keys[2], (d, d), dtype=jnp.float32) * w_scale
    wv = jax.random.normal(keys[3], (d, d), dtype=jnp.float32) * w_scale
    wo = jax.random.normal(keys[4], (d, d), dtype=jnp.float32) * w_scale
    # small scale keeps exp(<lq, lk>) in a sane numeric range
    lq1 = jax.random.normal(keys[5], (head_dim,), dtype=jnp.float32) * 0.05
    lq2 = jax.random.normal(keys[6], (head_dim,), dtype=jnp.float32) * 0.05
    lk1 = jax.random.normal(keys[7], (head_dim,), dtype=jnp.float32) * 0.05
    lk2 = jax.random.normal(keys[8], (head_dim,), dtype=jnp.float32) * 0.05

    out = differential_attention(x, wq, wk, wv, wo, lq1, lq2, lk1, lk2,
                                 heads, lambda_init)
    out = jax.block_until_ready(out)

    ref = reference(x, wq, wk, wv, wo, lq1, lq2, lk1, lk2, heads, lambda_init)
    assert out.shape == (b, s, d)
    assert bool(jnp.all(jnp.isfinite(out)))
    # bf16 MXU operands + bf16 intermediates -> relaxed tolerance vs f32 ref.
    assert jnp.allclose(out, ref, rtol=tol, atol=tol), (
        f"mismatch vs JAX reference (b={b}, s={s}, d={d}, heads={heads})")


if __name__ == "__main__":
    root = jax.random.PRNGKey(0)
    k1, k2 = jax.random.split(root)
    # Shapes implied by the original module example: x = torch.randn(2, 8, 256).
    _run_case(k1, b=2, s=8, d=256, heads=2, lambda_init=0.8, tol=2e-2)
    # Lane-aligned config exercising multi-tile flash streaming, the fused
    # (transpose-free) attention output layout, and the b==1 grid orderings.
    _run_case(k2, b=1, s=384, d=512, heads=4, lambda_init=0.8, tol=3e-2)
    print("KERNEL_OK")
</pallas_src>

<mosaic_0001>
module attributes {stable_mosaic.version = 11 : i64} {
  func.func @_qkv_proj_kernel(%arg0: i32, %arg1: i32, %arg2: i32, %arg3: memref<1x8x256xbf16, #tpu.memory_space<vmem>>, %arg4: memref<256x384xbf16, #tpu.memory_space<vmem>>, %arg5: memref<1x1x8x128xbf16, #tpu.memory_space<vmem>>, %arg6: memref<1x1x8x256xbf16, #tpu.memory_space<vmem>>) attributes {dimension_semantics = [#tpu.dimension_semantics<parallel>, #tpu.dimension_semantics<parallel>, #tpu.dimension_semantics<parallel>], iteration_bounds = array<i64: 2, 2, 1>, scalar_prefetch = 0 : i64, scratch_operands = 0 : i64, tpu.core_type = #tpu.core_type<tc>, window_params = [{transform_indices = @transform_0, window_bounds = array<i64: 1, 8, 256>}, {transform_indices = @transform_1, window_bounds = array<i64: 256, 384>}, {transform_indices = @transform_2, window_bounds = array<i64: 1, 1, 8, 128>}, {transform_indices = @transform_3, window_bounds = array<i64: 1, 1, 8, 256>}]} {
    %c0 = arith.constant 0 : index
    %c0_0 = arith.constant 0 : index
    %c0_1 = arith.constant 0 : index
    %0 = vector.load %arg3[%c0, %c0_0, %c0_1] : memref<1x8x256xbf16, #tpu.memory_space<vmem>>, vector<1x8x256xbf16>
    %1 = vector.shape_cast %0 : vector<1x8x256xbf16> to vector<8x256xbf16>
    %c0_2 = arith.constant 0 : index
    %c0_3 = arith.constant 0 : index
    %2 = vector.load %arg4[%c0_2, %c0_3] : memref<256x384xbf16, #tpu.memory_space<vmem>>, vector<256x384xbf16>
    %cst = arith.constant dense<0.000000e+00> : vector<8x384xf32>
    %3 = tpu.matmul %1, %2, %cst {dimension_numbers = #tpu.dot_dimension_numbers<[1], [0], [0], [1], [0, 0, 1, 1], [], []>} : vector<8x256xbf16>, vector<256x384xbf16>, vector<8x384xf32> -> vector<8x384xf32>
    %4 = vector.extract_strided_slice %3 {offsets = [0, 0], sizes = [8, 128], strides = [1, 1]} : vector<8x384xf32> to vector<8x128xf32>
    %cst_4 = arith.constant 0.0883883461 : f32
    %5 = vector.broadcast %cst_4 : f32 to vector<8x128xf32>
    %6 = arith.mulf %4, %5 : vector<8x128xf32>
    %7 = arith.truncf %6 : vector<8x128xf32> to vector<8x128xbf16>
    %c0_5 = arith.constant 0 : index
    %c0_6 = arith.constant 0 : index
    %c0_7 = arith.constant 0 : index
    %c0_8 = arith.constant 0 : index
    %8 = vector.load %arg5[%c0_5, %c0_6, %c0_7, %c0_8] : memref<1x1x8x128xbf16, #tpu.memory_space<vmem>>, vector<1x1x8x128xbf16>
    %9 = vector.shape_cast %8 : vector<1x1x8x128xbf16> to vector<8x128xbf16>
    %10 = vector.shape_cast %7 : vector<8x128xbf16> to vector<1x1x8x128xbf16>
    tpu.vector_store %arg5[%c0_5, %c0_6, %c0_7, %c0_8], %10 {strides = array<i32>} : memref<1x1x8x128xbf16, #tpu.memory_space<vmem>>, vector<1x1x8x128xbf16>,
    %11 = vector.extract_strided_slice %3 {offsets = [0, 128], sizes = [8, 256], strides = [1, 1]} : vector<8x384xf32> to vector<8x256xf32>
    %12 = arith.truncf %11 : vector<8x256xf32> to vector<8x256xbf16>
    %c0_9 = arith.constant 0 : index
    %c0_10 = arith.constant 0 : index
    %c0_11 = arith.constant 0 : index
    %c0_12 = arith.constant 0 : index
    %13 = vector.load %arg6[%c0_9, %c0_10, %c0_11, %c0_12] : memref<1x1x8x256xbf16, #tpu.memory_space<vmem>>, vector<1x1x8x256xbf16>
    %14 = vector.shape_cast %13 : vector<1x1x8x256xbf16> to vector<8x256xbf16>
    %15 = vector.shape_cast %12 : vector<8x256xbf16> to vector<1x1x8x256xbf16>
    tpu.vector_store %arg6[%c0_9, %c0_10, %c0_11, %c0_12], %15 {strides = array<i32>} : memref<1x1x8x256xbf16, #tpu.memory_space<vmem>>, vector<1x1x8x256xbf16>,
    return
  }
  func.func @transform_0(%arg0: i32, %arg1: i32, %arg2: i32) -> (i32, i32, i32) {
    %c0_i32 = arith.constant 0 : i32
    %c0_i32_0 = arith.constant 0 : i32
    return %arg1, %arg2, %c0_i32 : i32, i32, i32
  }
  func.func @transform_1(%arg0: i32, %arg1: i32, %arg2: i32) -> (i32, i32) {
    %c0_i32 = arith.constant 0 : i32
    %c0_i32_0 = arith.constant 0 : i32
    return %c0_i32, %arg0 : i32, i32
  }
  func.func @transform_2(%arg0: i32, %arg1: i32, %arg2: i32) -> (i32, i32, i32, i32) {
    %c0_i32 = arith.constant 0 : i32
    %c0_i32_0 = arith.constant 0 : i32
    return %arg1, %arg0, %arg2, %c0_i32 : i32, i32, i32, i32
  }
  func.func @transform_3(%arg0: i32, %arg1: i32, %arg2: i32) -> (i32, i32, i32, i32) {
    %c0_i32 = arith.constant 0 : i32
    %c0_i32_0 = arith.constant 0 : i32
    return %arg1, %arg0, %arg2, %c0_i32 : i32, i32, i32, i32
  }
}

</mosaic_0001>

<llo_original>
// kernel: tpu_custom_call.1
$region0: #{tpu_custom_call.1}
  #allocation0 [shape = 'u32[]', space=smem, size = 0x4, offset = 0x4, fixed_abs, tag = 'smem constant byte address 0x4 - core index']
  #allocation1 [shape = 'u32[72,128]{1,0:T(1,128)}', space=vmem, size = 0x9000, scoped, tag = 'internal scratch']
  %s0 = inlined_call_operand.hbm [shape: bf16[2,8,256], index: 0, kind: input, shape index: {}]
  %s1 = inlined_call_operand.hbm [shape: bf16[256,768], index: 1, kind: input, shape index: {}]
  %s2 = inlined_call_operand.hbm [shape: bf16[2,2,8,128], index: 2, kind: output, shape index: {0}]
  %s3 = inlined_call_operand.hbm [shape: bf16[2,2,8,256], index: 3, kind: output, shape index: {1}]
  %4 = xla_tuple %s2, %s3
  %s5 = sld [smem:[#allocation0]]
  $region57: #{tpu_custom_call.1} parent=0
    _
  %s7 = ssub.s32 1, %s5
  %s8 = scalar_select 0, %s7, %s5
  $region1: #{tpu_custom_call.1} parent=0
    #allocation2 [shape = 'u8[8192]{0}', space=vmem, size = 0x2000, scoped, tag = 'input window, operand 0']
    #allocation3 [shape = 's32[2]{0}', space=sflag, size = 0x8, scoped, tag = 'scoped memory for tpu_custom_call.1']
    #allocation4 [shape = 's32[2]{0}', space=sflag, size = 0x8, scoped, tag = 'scoped memory for tpu_custom_call.1']
    #allocation5 [shape = 'u8[393216]{0}', space=vmem, size = 0x60000, scoped, tag = 'input window, operand 1']
    #allocation6 [shape = 's32[2]{0}', space=sflag, size = 0x8, scoped, tag = 'scoped memory for tpu_custom_call.1']
    #allocation7 [shape = 'u8[4096]{0}', space=vmem, size = 0x1000, scoped, tag = 'output window, operand 0']
    #allocation8 [shape = 'u8[8192]{0}', space=vmem, size = 0x2000, scoped, tag = 'output window, operand 1']
    #allocation9 [shape = 's32[2]{0}', space=sflag, size = 0x8, scoped, tag = 'scoped memory for tpu_custom_call.1']
    %9 = vsyncpa [#allocation3], 0
    %s10 = scalar_lea.sflag [#allocation3], 1
    %11 = vsyncpa %s10, 0
    %12 = vsyncpa [#allocation6], 0
    %s13 = scalar_lea.sflag [#allocation6], 1
    %14 = vsyncpa %s13, 0
    %15 = vsyncpa [#allocation4], 0
    %s16 = scalar_lea.sflag [#allocation4], 1
    %17 = vsyncpa %s16, 0
    %18 = vsyncpa [#allocation9], 0
    %s19 = scalar_lea.sflag [#allocation9], 1
    %20 = vsyncpa %s19, 0
    loop: start=0, step=1, limit=6
    $region2: #{tpu_custom_call.1} parent=1 // loop_pre_header
      _
    $region3: #{tpu_custom_call.1} parent=1 // loop_header
      %s22 = sphi 0, %s26
      %p23 = scmp.ge.s32.totalorder %s22, 6
      %s29 = sphi 0, %s48
      %s30 = sphi 0, %s44
      %s31 = sphi 0, %s40
      %s32 = sphi 0, %s29
      %s33 = sphi 0, %s30
      %s34 = sphi 0, %s31
      %s35 = sphi 0, %s32
      %s36 = sphi 0, %s33
      %s37 = sphi 0, %s34
      %s53 = sphi 0, %s55
      %s56 = sphi 0, %s53
      %s57 = sphi 0, %s56
      %s73 = sphi 0, %s57
      %s79 = sphi 0, %s81
      %s82 = sphi 0, %s79
      %s83 = sphi 0, %s82
      %s99 = sphi 0, %s83
      %s109 = sphi 0, %s111
      %s112 = sphi 0, %s109
      %s113 = sphi 0, %s112
      %s129 = sphi 0, %s113
      %s139 = sphi 0, %s141
      %s142 = sphi 0, %s139
      %s143 = sphi 0, %s142
      %s159 = sphi 0, %s143
    $region4: #{tpu_custom_call.1} parent=1 // loop_header_branch
      %25 = sbr.rel (%p23) target = $region8
    $region5: #{tpu_custom_call.1} parent=1 // loop_body
      %s27 = ssub.s32 %s22, 1
      %s28 = ssub.s32 %s22, 2
      %s38 = sadd.s32 1, %s31
      %p39 = scmp.ge.s32.totalorder %s38, 1
      %s40 = scalar_select %p39, 0, %s38
      %s41 = sadd.s32 1, %s30
      %s42 = scalar_select %p39, %s41, %s30
      %p43 = scmp.ge.s32.totalorder %s42, 2
      %s44 = scalar_select %p43, 0, %s42
      %s45 = sadd.s32 1, %s29
      %s46 = scalar_select %p43, %s45, %s29
      %p47 = scmp.ge.s32.totalorder %s46, 2
      %s48 = scalar_select %p47, 0, %s46
      %s49 = ssub.s32 %s30, %s44
      %s50 = ssub.s32 %s31, %s40
      %s51 = sor.u32 %s49, %s50
      %p52 = scmp.eq.s32.totalorder %s51, 0
      %s54 = sadd.s32 %s53, 1
      %s55 = scalar_select %p52, %s53, %s54
      %p58 = pneg %p52
      %p59 = scmp.eq.s32.totalorder %s22, 3
      %p60 = por %p58, %p59
      %p61 = scmp.ne.s32.totalorder %s53, %s56
      %p62 = scmp.eq.s32.totalorder %s22, 0
      %p63 = por %p61, %p62
      %p64 = scmp.ne.s32.totalorder %s53, %s56
      %p65 = scmp.eq.s32.totalorder %s27, 3
      %p66 = por %p64, %p65
      %p67 = scmp.ne.s32.totalorder %s56, %s57
      %p68 = scmp.eq.s32.totalorder %s27, 0
      %p69 = por %p67, %p68
      %p70 = scmp.ne.s32.totalorder %s56, %s57
      %p71 = scmp.eq.s32.totalorder %s28, 3
      %p72 = por %p70, %p71
      %p74 = scmp.ne.s32.totalorder %s57, %s73
      %p75 = scmp.eq.s32.totalorder %s28, 0
      %p76 = por %p74, %p75
      %s77 = ssub.s32 %s29, %s48
      %p78 = scmp.eq.s32.totalorder %s77, 0
      %s80 = sadd.s32 %s79, 1
      %s81 = scalar_select %p78, %s79, %s80
      %p84 = pneg %p78
      %p85 = scmp.eq.s32.totalorder %s22, 3
      %p86 = por %p84, %p85
      %p87 = scmp.ne.s32.totalorder %s79, %s82
      %p88 = scmp.eq.s32.totalorder %s22, 0
      %p89 = por %p87, %p88
      %p90 = scmp.ne.s32.totalorder %s79, %s82
      %p91 = scmp.eq.s32.totalorder %s27, 3
      %p92 = por %p90, %p91
      %p93 = scmp.ne.s32.totalorder %s82, %s83
      %p94 = scmp.eq.s32.totalorder %s27, 0
      %p95 = por %p93, %p94
      %p96 = scmp.ne.s32.totalorder %s82, %s83
      %p97 = scmp.eq.s32.totalorder %s28, 3
      %p98 = por %p96, %p97
      %p100 = scmp.ne.s32.totalorder %s83, %s99
      %p101 = scmp.eq.s32.totalorder %s28, 0
      %p102 = por %p100, %p101
      %s103 = ssub.s32 %s30, %s44
      %s104 = ssub.s32 %s29, %s48
      %s105 = sor.u32 %s103, %s104
      %s106 = ssub.s32 %s31, %s40
      %s107 = sor.u32 %s105, %s106
      %p108 = scmp.eq.s32.totalorder %s107, 0
      %s110 = sadd.s32 %s109, 1
      %s111 = scalar_select %p108, %s109, %s110
      %p114 = pneg %p108
      %p115 = scmp.eq.s32.totalorder %s22, 3
      %p116 = por %p114, %p115
      %p117 = scmp.ne.s32.totalorder %s109, %s112
      %p118 = scmp.eq.s32.totalorder %s22, 0
      %p119 = por %p117, %p118
      %p120 = scmp.ne.s32.totalorder %s109, %s112
      %p121 = scmp.eq.s32.totalorder %s27, 3
      %p122 = por %p120, %p121
      %p123 = scmp.ne.s32.totalorder %s112, %s113
      %p124 = scmp.eq.s32.totalorder %s27, 0
      %p125 = por %p123, %p124
      %p126 = scmp.ne.s32.totalorder %s112, %s113
      %p127 = scmp.eq.s32.totalorder %s28, 3
      %p128 = por %p126, %p127
      %p130 = scmp.ne.s32.totalorder %s113, %s129
      %p131 = scmp.eq.s32.totalorder %s28, 0
      %p132 = por %p130, %p131
      %s133 = ssub.s32 %s30, %s44
      %s134 = ssub.s32 %s29, %s48
      %s135 = sor.u32 %s133, %s134
      %s136 = ssub.s32 %s31, %s40
      %s137 = sor.u32 %s135, %s136
      %p138 = scmp.eq.s32.totalorder %s137, 0
      %s140 = sadd.s32 %s139, 1
      %s141 = scalar_select %p138, %s139, %s140
      %p144 = pneg %p138
      %p145 = scmp.eq.s32.totalorder %s22, 3
      %p146 = por %p144, %p145
      %p147 = scmp.ne.s32.totalorder %s139, %s142
      %p148 = scmp.eq.s32.totalorder %s22, 0
      %p149 = por %p147, %p148
      %p150 = scmp.ne.s32.totalorder %s139, %s142
      %p151 = scmp.eq.s32.totalorder %s27, 3
      %p152 = por %p150, %p151
      %p153 = scmp.ne.s32.totalorder %s142, %s143
      %p154 = scmp.eq.s32.totalorder %s27, 0
      %p155 = por %p153, %p154
      %p156 = scmp.ne.s32.totalorder %s142, %s143
      %p157 = scmp.eq.s32.totalorder %s28, 3
      %p158 = por %p156, %p157
      %p160 = scmp.ne.s32.totalorder %s143, %s159
      %p161 = scmp.eq.s32.totalorder %s28, 0
      %p162 = por %p160, %p161
      %p163 = scmp.le.s32.totalorder 1, %s22
      %p164 = scmp.lt.s32.totalorder %s22, 5
      %p165 = pnand %p163, %p164
      %p166 = pneg %p165
      // Predicated region
      $region9: #{tpu_custom_call.1} parent=5 // pred_check
        _
      $region10: #{tpu_custom_call.1} parent=5 // pred_check_branch
        %168 = sbr.rel (%p165) target = $region12
      $region11: #{tpu_custom_call.1} parent=5 // pred_region
        %s169 = ssub.s32 %s22, 1
      $region12: #{tpu_custom_call.1} parent=5 // pred_fallthru
        _
      %p170 = scmp.lt.s32.totalorder %s22, 4
      // Predicated region
      $region13: #{tpu_custom_call.1} parent=5 // pred_check
        %p171 = pneg %p170
      $region14: #{tpu_custom_call.1} parent=5 // pred_check_branch
        %173 = sbr.rel (%p171) target = $region16
      $region15: #{tpu_custom_call.1} parent=5 // pred_region
        // Predicated region
        $region17: #{tpu_custom_call.1} parent=15 // pred_check
          %p174 = pneg %p63
        $region18: #{tpu_custom_call.1} parent=15 // pred_check_branch
          %176 = sbr.rel (%p174) target = $region20
        $region19: #{tpu_custom_call.1} parent=15 // pred_region
          %s177 = sand.u32 %s53, 1
          %s178 = scalar_lea.sflag [#allocation3], %s177
          %s179 = sand.u32 %s53, 1
          %s180 = smul.addr %s179, 8
          %s181 = scalar_lea.vmem [#allocation2], %s180
          %183 = vsyncadd %s178, 0
          %s184 = smul.addr %s31, 2
          %s185 = smul.addr %s30, 2
          %s186 = sadd.s32 %s184, %s185
          %s187 = smul.addr %s186, 4
          %s188 = scalar_lea.hbm %s0, %s187
          %s190 = sshll.u32 %s188, 4
          %s191 = int_to_ptr.hbm [resolvable:$true] %s190
          %s192 = sshll.u32 %s181, 4
          %s193 = int_to_ptr.vmem [resolvable:$true] %s192
          %195 = dma.hbm_to_vmem [thread:$0]  %s191, 128, %s193, %s178
        $region20: #{tpu_custom_call.1} parent=15 // pred_fallthru
          _
        // Predicated region
        $region21: #{tpu_custom_call.1} parent=15 // pred_check
          %p196 = pneg %p89
        $region22: #{tpu_custom_call.1} parent=15 // pred_check_branch
          %198 = sbr.rel (%p196) target = $region24
        $region23: #{tpu_custom_call.1} parent=15 // pred_region
          %s199 = sand.u32 %s79, 1
          %s200 = scalar_lea.sflag [#allocation6], %s199
          %s201 = sand.u32 %s79, 1
          %s202 = smul.addr %s201, 384
          %s203 = scalar_lea.vmem [#allocation5], %s202
          %s204 = smul.u32 3, %s29
          %206 = vsyncadd %s200, 0
          %s207 = smul.addr %s204, 4
          %s208 = scalar_lea.hbm %s1, %s207
          %s209 = sshll.u32 %s208, 4
          %s210 = int_to_ptr.hbm [resolvable:$true] %s209
          %s211 = sshll.u32 %s203, 4
          %s212 = int_to_ptr.vmem [resolvable:$true] %s211
          %217 = dma.hbm_to_vmem [thread:$0]  %s210, 6144, %s212, %s200, 384, 192, 12
        $region24: #{tpu_custom_call.1} parent=15 // pred_fallthru
          _
      $region16: #{tpu_custom_call.1} parent=5 // pred_fallthru
        _
      %p218 = scmp.le.s32.totalorder 1, %s22
      %p219 = scmp.lt.s32.totalorder %s22, 5
      %p220 = pnand %p218, %p219
      %p221 = pneg %p220
      // Predicated region
      $region25: #{tpu_custom_call.1} parent=5 // pred_check
        _
      $region26: #{tpu_custom_call.1} parent=5 // pred_check_branch
        %223 = sbr.rel (%p220) target = $region28
      $region27: #{tpu_custom_call.1} parent=5 // pred_region
        %s224 = ssub.s32 %s22, 1
        %s225 = sand.u32 %s56, 1
        %s226 = scalar_lea.sflag [#allocation3], %s225
        %s227 = sand.u32 %s56, 1
        %s228 = smul.addr %s227, 8
        %s229 = scalar_lea.vmem [#allocation2], %s228
        // Predicated region
        $region29: #{tpu_custom_call.1} parent=27 // pred_check
          %p230 = pneg %p69
        $region30: #{tpu_custom_call.1} parent=27 // pred_check_branch
          %232 = sbr.rel (%p230) target = $region32
        $region31: #{tpu_custom_call.1} parent=27 // pred_region
          %234 = dma.done %s226, 128
        $region32: #{tpu_custom_call.1} parent=27 // pred_fallthru
          _
        %s235 = sand.u32 %s82, 1
        %s236 = scalar_lea.sflag [#allocation6], %s235
        %s237 = sand.u32 %s82, 1
        %s238 = smul.addr %s237, 384
        %s239 = scalar_lea.vmem [#allocation5], %s238
        // Predicated region
        $region33: #{tpu_custom_call.1} parent=27 // pred_check
          %p240 = pneg %p95
        $region34: #{tpu_custom_call.1} parent=27 // pred_check_branch
          %242 = sbr.rel (%p240) target = $region36
        $region35: #{tpu_custom_call.1} parent=27 // pred_region
          %244 = dma.done %s236, 6144
        $region36: #{tpu_custom_call.1} parent=27 // pred_fallthru
          _
        %s245 = sand.u32 %s56, 1
        %s246 = scalar_lea.sflag [#allocation3], %s245
        %s247 = sand.u32 %s56, 1
        %s248 = smul.addr %s247, 8
        %s249 = scalar_lea.vmem [#allocation2], %s248
        %p250 = pneg %p69
        %p251 = pneg %p66
        %s252 = sand.u32 %s82, 1
        %s253 = scalar_lea.sflag [#allocation6], %s252
        %s254 = sand.u32 %s82, 1
        %s255 = smul.addr %s254, 384
        %s256 = scalar_lea.vmem [#allocation5], %s255
        %p257 = pneg %p95
        %p258 = pneg %p92
        %p259 = pneg %p125
        %p260 = pneg %p122
        %s261 = sand.u32 %s112, 1
        %s262 = scalar_lea.sflag [#allocation4], %s261
        %s263 = sand.u32 %s112, 1
        %s264 = smul.addr %s263, 4
        %s265 = scalar_lea.vmem [#allocation7], %s264
        %p266 = pneg %p155
        %p267 = pneg %p152
        %s268 = sand.u32 %s142, 1
        %s269 = scalar_lea.sflag [#allocation9], %s268
        %s270 = sand.u32 %s142, 1
        %s271 = smul.addr %s270, 8
        %s272 = scalar_lea.vmem [#allocation8], %s271
        %s273 = smul.u32 3, %s32
        %v274 = vld [vmem:[%s229] sm:$0xff]
        %v275 = vld [vmem:[%s239] sm:$0xff]
        %v276 = vld [vmem:[%s239 + $0x8] sm:$0xf]
        %v277 = vld [vmem:[%s239 + $0xc] sm:$0xff]
        %v278 = vld [vmem:[%s239 + $0x14] sm:$0xf]
        %v279 = vld [vmem:[%s239 + $0x18] sm:$0xff]
        %v280 = vld [vmem:[%s239 + $0x20] sm:$0xf]
        %v281 = vld [vmem:[%s239 + $0x24] sm:$0xff]
        %v282 = vld [vmem:[%s239 + $0x2c] sm:$0xf]
        %v283 = vld [vmem:[%s239 + $0x30] sm:$0xff]
        %v284 = vld [vmem:[%s239 + $0x38] sm:$0xf]
        %v285 = vld [vmem:[%s239 + $0x3c] sm:$0xff]
        %v286 = vld [vmem:[%s239 + $0x44] sm:$0xf]
        %v287 = vld [vmem:[%s239 + $0x48] sm:$0xff]
        %v288 = vld [vmem:[%s239 + $0x50] sm:$0xf]
        %v289 = vld [vmem:[%s239 + $0x54] sm:$0xff]
        %v290 = vld [vmem:[%s239 + $0x5c] sm:$0xf]
        %v291 = vld [vmem:[%s239 + $0x60] sm:$0xff]
        %v292 = vld [vmem:[%s239 + $0x68] sm:$0xf]
        %v293 = vld [vmem:[%s239 + $0x6c] sm:$0xff]
        %v294 = vld [vmem:[%s239 + $0x74] sm:$0xf]
        %v295 = vld [vmem:[%s239 + $0x78] sm:$0xff]
        %v296 = vld [vmem:[%s239 + $0x80] sm:$0xf]
        %v297 = vld [vmem:[%s239 + $0x84] sm:$0xff]
        %v298 = vld [vmem:[%s239 + $0x8c] sm:$0xf]
        %v299 = vld [vmem:[%s239 + $0x90] sm:$0xff]
        %v300 = vld [vmem:[%s239 + $0x98] sm:$0xf]
        %v301 = vld [vmem:[%s239 + $0x9c] sm:$0xff]
        %v302 = vld [vmem:[%s239 + $0xa4] sm:$0xf]
        %v303 = vld [vmem:[%s239 + $0xa8] sm:$0xff]
        %v304 = vld [vmem:[%s239 + $0xb0] sm:$0xf]
        %v305 = vld [vmem:[%s239 + $0xb4] sm:$0xff]
        %v306 = vld [vmem:[%s239 + $0xbc] sm:$0xf]
        %v307 = vld [vmem:[%s239 + $0xc0] sm:$0xff]
        %v308 = vld [vmem:[%s239 + $0xc8] sm:$0xf]
        %v309 = vld [vmem:[%s239 + $0xcc] sm:$0xff]
        %v310 = vld [vmem:[%s239 + $0xd4] sm:$0xf]
        %v311 = vld [vmem:[%s239 + $0xd8] sm:$0xff]
        %v312 = vld [vmem:[%s239 + $0xe0] sm:$0xf]
        %v313 = vld [vmem:[%s239 + $0xe4] sm:$0xff]
        %v314 = vld [vmem:[%s239 + $0xec] sm:$0xf]
        %v315 = vld [vmem:[%s239 + $0xf0] sm:$0xff]
        %v316 = vld [vmem:[%s239 + $0xf8] sm:$0xf]
        %v317 = vld [vmem:[%s239 + $0xfc] sm:$0xff]
        %v318 = vld [vmem:[%s239 + $0x104] sm:$0xf]
        %v319 = vld [vmem:[%s239 + $0x108] sm:$0xff]
        %v320 = vld [vmem:[%s239 + $0x110] sm:$0xf]
        %v321 = vld [vmem:[%s239 + $0x114] sm:$0xff]
        %v322 = vld [vmem:[%s239 + $0x11c] sm:$0xf]
        %v323 = vld [vmem:[%s239 + $0x120] sm:$0xff]
        %v324 = vld [vmem:[%s239 + $0x128] sm:$0xf]
        %v325 = vld [vmem:[%s239 + $0x12c] sm:$0xff]
        %v326 = vld [vmem:[%s239 + $0x134] sm:$0xf]
        %v327 = vld [vmem:[%s239 + $0x138] sm:$0xff]
        %v328 = vld [vmem:[%s239 + $0x140] sm:$0xf]
        %v329 = vld [vmem:[%s239 + $0x144] sm:$0xff]
        %v330 = vld [vmem:[%s239 + $0x14c] sm:$0xf]
        %v331 = vld [vmem:[%s239 + $0x150] sm:$0xff]
        %v332 = vld [vmem:[%s239 + $0x158] sm:$0xf]
        %v333 = vld [vmem:[%s239 + $0x15c] sm:$0xff]
        %v334 = vld [vmem:[%s239 + $0x164] sm:$0xf]
        %v335 = vld [vmem:[%s239 + $0x168] sm:$0xff]
        %v336 = vld [vmem:[%s239 + $0x170] sm:$0xf]
        %v337 = vld [vmem:[%s239 + $0x174] sm:$0xff]
        %v338 = vld [vmem:[%s239 + $0x17c] sm:$0xf]
        %v340 = vunpack.c.l.b16 %v274
        %v341 = vunpack.c.h.b16 %v274
        %v342 = vpack.c.b16 %v340, %v340
        %v343 = vpack.c.b16 %v341, %v341
        %v410 = vunpack.c.l.b16 %v275
        %v411 = vunpack.c.h.b16 %v275
        %v412 = vunpack.c.l.b16 %v276
        %v413 = vunpack.c.l.b16 %v277
        %v414 = vunpack.c.h.b16 %v277
        %v415 = vunpack.c.l.b16 %v278
        %v416 = vunpack.c.l.b16 %v279
        %v417 = vunpack.c.h.b16 %v279
        %v418 = vunpack.c.l.b16 %v280
        %v419 = vunpack.c.l.b16 %v281
        %v420 = vunpack.c.h.b16 %v281
        %v421 = vunpack.c.l.b16 %v282
        %v422 = vunpack.c.l.b16 %v283
        %v423 = vunpack.c.h.b16 %v283
        %v424 = vunpack.c.l.b16 %v284
        %v425 = vunpack.c.l.b16 %v285
        %v426 = vunpack.c.h.b16 %v285
        %v427 = vunpack.c.l.b16 %v286
        %v428 = vunpack.c.l.b16 %v287
        %v429 = vunpack.c.h.b16 %v287
        %v430 = vunpack.c.l.b16 %v288
        %v431 = vunpack.c.l.b16 %v289
        %v432 = vunpack.c.h.b16 %v289
        %v433 = vunpack.c.l.b16 %v290
        %v434 = vunpack.c.l.b16 %v291
        %v435 = vunpack.c.h.b16 %v291
        %v436 = vunpack.c.l.b16 %v292
        %v437 = vunpack.c.l.b16 %v293
        %v438 = vunpack.c.h.b16 %v293
        %v439 = vunpack.c.l.b16 %v294
        %v440 = vunpack.c.l.b16 %v295
        %v441 = vunpack.c.h.b16 %v295
        %v442 = vunpack.c.l.b16 %v296
        %v443 = vunpack.c.l.b16 %v297
        %v444 = vunpack.c.h.b16 %v297
        %v445 = vunpack.c.l.b16 %v298
        %v446 = vunpack.c.l.b16 %v299
        %v447 = vunpack.c.h.b16 %v299
        %v448 = vunpack.c.l.b16 %v300
        %v449 = vunpack.c.l.b16 %v301
        %v450 = vunpack.c.h.b16 %v301
        %v451 = vunpack.c.l.b16 %v302
        %v452 = vunpack.c.l.b16 %v303
        %v453 = vunpack.c.h.b16 %v303
        %v454 = vunpack.c.l.b16 %v304
        %v455 = vunpack.c.l.b16 %v305
        %v456 = vunpack.c.h.b16 %v305
        %v457 = vunpack.c.l.b16 %v306
        %v458 = vunpack.c.l.b16 %v307
        %v459 = vunpack.c.h.b16 %v307
        %v460 = vunpack.c.l.b16 %v308
        %v461 = vunpack.c.l.b16 %v309
        %v462 = vunpack.c.h.b16 %v309
        %v463 = vunpack.c.l.b16 %v310
        %v464 = vunpack.c.l.b16 %v311
        %v465 = vunpack.c.h.b16 %v311
        %v466 = vunpack.c.l.b16 %v312
        %v467 = vunpack.c.l.b16 %v313
        %v468 = vunpack.c.h.b16 %v313
        %v469 = vunpack.c.l.b16 %v314
        %v470 = vunpack.c.l.b16 %v315
        %v471 = vunpack.c.h.b16 %v315
        %v472 = vunpack.c.l.b16 %v316
        %v473 = vunpack.c.l.b16 %v317
        %v474 = vunpack.c.h.b16 %v317
        %v475 = vunpack.c.l.b16 %v318
        %v476 = vunpack.c.l.b16 %v319
        %v477 = vunpack.c.h.b16 %v319
        %v478 = vunpack.c.l.b16 %v320
        %v479 = vunpack.c.l.b16 %v321
        %v480 = vunpack.c.h.b16 %v321
        %v481 = vunpack.c.l.b16 %v322
        %v482 = vunpack.c.l.b16 %v323
        %v483 = vunpack.c.h.b16 %v323
        %v484 = vunpack.c.l.b16 %v324
        %v485 = vunpack.c.l.b16 %v325
        %v486 = vunpack.c.h.b16 %v325
        %v487 = vunpack.c.l.b16 %v326
        %v488 = vunpack.c.l.b16 %v327
        %v489 = vunpack.c.h.b16 %v327
        %v490 = vunpack.c.l.b16 %v328
        %v491 = vunpack.c.l.b16 %v329
        %v492 = vunpack.c.h.b16 %v329
        %v493 = vunpack.c.l.b16 %v330
        %v494 = vunpack.c.l.b16 %v331
        %v495 = vunpack.c.h.b16 %v331
        %v496 = vunpack.c.l.b16 %v332
        %v497 = vunpack.c.l.b16 %v333
        %v498 = vunpack.c.h.b16 %v333
        %v499 = vunpack.c.l.b16 %v334
        %v500 = vunpack.c.l.b16 %v335
        %v501 = vunpack.c.h.b16 %v335
        %v502 = vunpack.c.l.b16 %v336
        %v503 = vunpack.c.l.b16 %v337
        %v504 = vunpack.c.h.b16 %v337
        %v505 = vunpack.c.l.b16 %v338
        %v506 = vpack.c.b16 %v413, %v410
        %v507 = vpack.c.b16 %v414, %v411
        %v508 = vpack.c.b16 %v415, %v412
        %v509 = vpack.c.b16 %v419, %v416
        %v510 = vpack.c.b16 %v420, %v417
        %v511 = vpack.c.b16 %v421, %v418
        %v512 = vpack.c.b16 %v425, %v422
        %v513 = vpack.c.b16 %v426, %v423
        %v514 = vpack.c.b16 %v427, %v424
        %v515 = vpack.c.b16 %v431, %v428
        %v516 = vpack.c.b16 %v432, %v429
        %v517 = vpack.c.b16 %v433, %v430
        %v518 = vpack.c.b16 %v437, %v434
        %v519 = vpack.c.b16 %v438, %v435
        %v520 = vpack.c.b16 %v439, %v436
        %v521 = vpack.c.b16 %v443, %v440
        %v522 = vpack.c.b16 %v444, %v441
        %v523 = vpack.c.b16 %v445, %v442
        %v524 = vpack.c.b16 %v449, %v446
        %v525 = vpack.c.b16 %v450, %v447
        %v526 = vpack.c.b16 %v451, %v448
        %v527 = vpack.c.b16 %v455, %v452
        %v528 = vpack.c.b16 %v456, %v453
        %v529 = vpack.c.b16 %v457, %v454
        %v530 = vpack.c.b16 %v461, %v458
        %v531 = vpack.c.b16 %v462, %v459
        %v532 = vpack.c.b16 %v463, %v460
        %v533 = vpack.c.b16 %v467, %v464
        %v534 = vpack.c.b16 %v468, %v465
        %v535 = vpack.c.b16 %v469, %v466
        %v536 = vpack.c.b16 %v473, %v470
        %v537 = vpack.c.b16 %v474, %v471
        %v538 = vpack.c.b16 %v475, %v472
        %v539 = vpack.c.b16 %v479, %v476
        %v540 = vpack.c.b16 %v480, %v477
        %v541 = vpack.c.b16 %v481, %v478
        %v542 = vpack.c.b16 %v485, %v482
        %v543 = vpack.c.b16 %v486, %v483
        %v544 = vpack.c.b16 %v487, %v484
        %v545 = vpack.c.b16 %v491, %v488
        %v546 = vpack.c.b16 %v492, %v489
        %v547 = vpack.c.b16 %v493, %v490
        %v548 = vpack.c.b16 %v497, %v494
        %v549 = vpack.c.b16 %v498, %v495
        %v550 = vpack.c.b16 %v499, %v496
        %v551 = vpack.c.b16 %v503, %v500
        %v552 = vpack.c.b16 %v504, %v501
        %v553 = vpack.c.b16 %v505, %v502
        %602 = vmatpush.bf16.msra.mxu0 %v527
        %603 = vmatpush.bf16.msra.mxu0 %v524
        %604 = vmatpush.bf16.msra.mxu0 %v521
        %605 = vmatpush.bf16.msra.mxu0 %v518
        %606 = vmatpush.bf16.msra.mxu0 %v515
        %607 = vmatpush.bf16.msra.mxu0 %v512
        %608 = vmatpush.bf16.msra.mxu0 %v509
        %609 = vmatpush.bf16.msra.mxu0 %v506
        %610 = vmatmul.bf16.gmra.mxu0 %v342
        %v611 = vpop.f32.mrf.mxu0
        %v612 = vadd.f32 0.0, %v611
        %v613 = vpop.f32.mrf.mxu0
        %614 = vdwg.mxu0
        %615 = vmatpush.bf16.msra.mxu0 %v551
        %616 = vmatpush.bf16.msra.mxu0 %v548
        %617 = vmatpush.bf16.msra.mxu0 %v545
        %618 = vmatpush.bf16.msra.mxu0 %v542
        %619 = vmatpush.bf16.msra.mxu0 %v539
        %620 = vmatpush.bf16.msra.mxu0 %v536
        %621 = vmatpush.bf16.msra.mxu0 %v533
        %622 = vmatpush.bf16.msra.mxu0 %v530
        %623 = vmatmul.bf16.gmra.mxu0 %v343
        %v624 = vpop.f32.mrf.mxu0
        %v625 = vadd.f32 %v612, %v624
        %v626 = vpop.f32.mrf.mxu0
        %627 = vdwg.mxu0
        %628 = vmatpush.bf16.msra.mxu0 %v528
        %629 = vmatpush.bf16.msra.mxu0 %v525
        %630 = vmatpush.bf16.msra.mxu0 %v522
        %631 = vmatpush.bf16.msra.mxu0 %v519
        %632 = vmatpush.bf16.msra.mxu0 %v516
        %633 = vmatpush.bf16.msra.mxu0 %v513
        %634 = vmatpush.bf16.msra.mxu0 %v510
        %635 = vmatpush.bf16.msra.mxu0 %v507
        %636 = vmatmul.bf16.gmra.mxu0 %v342
        %v637 = vpop.f32.mrf.mxu0
        %v638 = vadd.f32 0.0, %v637
        %v639 = vpop.f32.mrf.mxu0
        %640 = vdwg.mxu0
        %641 = vmatpush.bf16.msra.mxu0 %v552
        %642 = vmatpush.bf16.msra.mxu0 %v549
        %643 = vmatpush.bf16.msra.mxu0 %v546
        %644 = vmatpush.bf16.msra.mxu0 %v543
        %645 = vmatpush.bf16.msra.mxu0 %v540
        %646 = vmatpush.bf16.msra.mxu0 %v537
        %647 = vmatpush.bf16.msra.mxu0 %v534
        %648 = vmatpush.bf16.msra.mxu0 %v531
        %649 = vmatmul.bf16.gmra.mxu0 %v343
        %v650 = vpop.f32.mrf.mxu0
        %v651 = vadd.f32 %v638, %v650
        %v652 = vpop.f32.mrf.mxu0
        %653 = vdwg.mxu0
        %654 = vmatpush.bf16.msra.mxu0 %v529
        %655 = vmatpush.bf16.msra.mxu0 %v526
        %656 = vmatpush.bf16.msra.mxu0 %v523
        %657 = vmatpush.bf16.msra.mxu0 %v520
        %658 = vmatpush.bf16.msra.mxu0 %v517
        %659 = vmatpush.bf16.msra.mxu0 %v514
        %660 = vmatpush.bf16.msra.mxu0 %v511
        %661 = vmatpush.bf16.msra.mxu0 %v508
        %662 = vmatmul.bf16.gmra.mxu0 %v342
        %v663 = vpop.f32.mrf.mxu0
        %v664 = vadd.f32 0.0, %v663
        %v665 = vpop.f32.mrf.mxu0
        %666 = vdwg.mxu0
        %667 = vmatpush.bf16.msra.mxu0 %v553
        %668 = vmatpush.bf16.msra.mxu0 %v550
        %669 = vmatpush.bf16.msra.mxu0 %v547
        %670 = vmatpush.bf16.msra.mxu0 %v544
        %671 = vmatpush.bf16.msra.mxu0 %v541
        %672 = vmatpush.bf16.msra.mxu0 %v538
        %673 = vmatpush.bf16.msra.mxu0 %v535
        %674 = vmatpush.bf16.msra.mxu0 %v532
        %675 = vmatmul.bf16.gmra.mxu0 %v343
        %v676 = vpop.f32.mrf.mxu0
        %v677 = vadd.f32 %v664, %v676
        %v678 = vpop.f32.mrf.mxu0
        %679 = vdwg.mxu0
        %v680 = vmul.f32 %v625, 0.088388346
        %v681 = vpack.c.bf16 %v680, %v680
        %682 = vst [vmem:[%s265] sm:$0xf] %v681
        %v683 = vpack.c.bf16 %v677, %v651
        %684 = vst [vmem:[%s272] sm:$0xff] %v683
        %s685 = sand.u32 %s112, 1
        %s686 = scalar_lea.sflag [#allocation4], %s685
        %s687 = sand.u32 %s112, 1
        %s688 = smul.addr %s687, 4
        %s689 = scalar_lea.vmem [#allocation7], %s688
        %s690 = sand.u32 %s142, 1
        %s691 = scalar_lea.sflag [#allocation9], %s690
        %s692 = sand.u32 %s142, 1
        %s693 = smul.addr %s692, 8
        %s694 = scalar_lea.vmem [#allocation8], %s693
        // Predicated region
        $region37: #{tpu_custom_call.1} parent=27 // pred_check
          %p695 = pneg %p122
        $region38: #{tpu_custom_call.1} parent=27 // pred_check_branch
          %697 = sbr.rel (%p695) target = $region40
        $region39: #{tpu_custom_call.1} parent=27 // pred_region
          %699 = vsyncadd %s686, 0
          %s700 = sadd.s32 %s34, %s32
          %s701 = smul.addr %s33, 2
          %s702 = sadd.s32 %s700, %s701
          %s703 = smul.addr %s702, 4
          %s704 = scalar_lea.hbm %s2, %s703
          %s706 = sshll.u32 %s689, 4
          %s707 = int_to_ptr.vmem [resolvable:$true] %s706
          %s708 = sshll.u32 %s704, 4
          %s709 = int_to_ptr.hbm [resolvable:$true] %s708
          %711 = dma.vmem_to_hbm [thread:$0]  %s707, 64, %s709, %s686
        $region40: #{tpu_custom_call.1} parent=27 // pred_fallthru
          _
        // Predicated region
        $region41: #{tpu_custom_call.1} parent=27 // pred_check
          %p712 = pneg %p152
        $region42: #{tpu_custom_call.1} parent=27 // pred_check_branch
          %714 = sbr.rel (%p712) target = $region44
        $region43: #{tpu_custom_call.1} parent=27 // pred_region
          %716 = vsyncadd %s691, 0
          %s717 = smul.addr %s34, 2
          %s718 = smul.addr %s32, 2
          %s719 = sadd.s32 %s717, %s718
          %s720 = smul.addr %s33, 4
          %s721 = sadd.s32 %s719, %s720
          %s722 = smul.addr %s721, 4
          %s723 = scalar_lea.hbm %s3, %s722
          %s725 = sshll.u32 %s694, 4
          %s726 = int_to_ptr.vmem [resolvable:$true] %s725
          %s727 = sshll.u32 %s723, 4
          %s728 = int_to_ptr.hbm [resolvable:$true] %s727
          %730 = dma.vmem_to_hbm [thread:$0]  %s726, 128, %s728, %s691
        $region44: #{tpu_custom_call.1} parent=27 // pred_fallthru
          _
      $region28: #{tpu_custom_call.1} parent=5 // pred_fallthru
        _
      %p731 = scmp.le.s32.totalorder 2, %s22
      // Predicated region
      $region45: #{tpu_custom_call.1} parent=5 // pred_check
        %p732 = pneg %p731
      $region46: #{tpu_custom_call.1} parent=5 // pred_check_branch
        %734 = sbr.rel (%p732) target = $region48
      $region47: #{tpu_custom_call.1} parent=5 // pred_region
        %s735 = ssub.s32 %s22, 2
        // Predicated region
        $region49: #{tpu_custom_call.1} parent=47 // pred_check
          %p736 = pneg %p128
        $region50: #{tpu_custom_call.1} parent=47 // pred_check_branch
          %738 = sbr.rel (%p736) target = $region52
        $region51: #{tpu_custom_call.1} parent=47 // pred_region
          %s739 = sand.u32 %s113, 1
          %s740 = scalar_lea.sflag [#allocation4], %s739
          %s741 = sand.u32 %s113, 1
          %s742 = smul.addr %s741, 4
          %s743 = scalar_lea.vmem [#allocation7], %s742
          %745 = dma.done %s740, 64
        $region52: #{tpu_custom_call.1} parent=47 // pred_fallthru
          _
        // Predicated region
        $region53: #{tpu_custom_call.1} parent=47 // pred_check
          %p746 = pneg %p158
        $region54: #{tpu_custom_call.1} parent=47 // pred_check_branch
          %748 = sbr.rel (%p746) target = $region56
        $region55: #{tpu_custom_call.1} parent=47 // pred_region
          %s749 = sand.u32 %s143, 1
          %s750 = scalar_lea.sflag [#allocation9], %s749
          %s751 = sand.u32 %s143, 1
          %s752 = smul.addr %s751, 8
          %s753 = scalar_lea.vmem [#allocation8], %s752
          %755 = dma.done %s750, 128
        $region56: #{tpu_custom_call.1} parent=47 // pred_fallthru
          _
      $region48: #{tpu_custom_call.1} parent=5 // pred_fallthru
        _
    $region6: #{tpu_custom_call.1} parent=1 // loop_footer
      %s26 = sadd.s32 1, %s22
    $region7: #{tpu_custom_call.1} parent=1 // loop_footer_branch
      %21 = sbr.rel target = $region3
    $region8: #{tpu_custom_call.1} parent=1 // loop_exit
      _
    %756 = vsyncpa [#allocation3], 1
    %s757 = scalar_lea.sflag [#allocation3], 1
    %758 = vsyncpa %s757, 1
    %759 = vsyncpa [#allocation6], 1
    %s760 = scalar_lea.sflag [#allocation6], 1
    %761 = vsyncpa %s760, 1
    %762 = vsyncpa [#allocation4], 1
    %s763 = scalar_lea.sflag [#allocation4], 1
    %764 = vsyncpa %s763, 1
    %765 = vsyncpa [#allocation9], 1
    %s766 = scalar_lea.sflag [#allocation9], 1
    %767 = vsyncpa %s766, 1

</llo_original>
